<compile_context>
chip_gen: v6e
topology: v6e:2x2x1
jax: 0.10.0
libtpu: 0.0.40
codegen_flags: <defaults>
</compile_context>

<pallas_src>
import functools

import jax
import jax.numpy as jnp
from jax.experimental import pallas as pl
from jax.experimental.pallas import tpu as pltpu

# ------------------------- module hyper-parameters -------------------------
CHAR_VOCAB_SIZE = 20          # V
CHAR_EMB_SIZE = 16            # E
PAD_INDEX = 0
CHAR_TYPE = "conv"
CHAR_FILTER_SIZES = (3, 5)
CHAR_NUM_FILTERS = (8, 16)
CHAR_CONV_ACT = "tanh"
DROPOUT_FRAC = 0.0            # eval / p=0 -> identity inside the kernel
TAGSET_SIZES = (5, 7)
CHAR_SIZE = sum(CHAR_NUM_FILTERS)


def _round_up(x, m):
    return (x + m - 1) // m * m


# --------------------------- one-time weight prep ----------------------------
def prepare_params(params, seq_len):
    """Fold embedding + conv weights into one char-id-space filter bank and pre-lay-out
    every weight so the kernel needs zero transposes / slices.  Done once per
    checkpoint / sequence length (pure weight plumbing)."""
    fs_max = max(CHAR_FILTER_SIZES)
    t_pad = _round_up(seq_len + fs_max - 1, 8)        # sublane-aligned #conv positions
    emb = params['emb']                               # (V, E); PAD row is zero
    V = emb.shape[0]

    w_cols, b_cols, m_cols = [], [], []
    for fs, nf, w, b in zip(CHAR_FILTER_SIZES, CHAR_NUM_FILTERS,
                            params['conv_w'], params['conv_b']):
        # filter expressed directly over char ids: wid[k, v, f] = emb[v] . w[f, k]
        wid = jnp.einsum('ve,fke->kvf', emb, w)                       # (fs, V, F)
        off = fs_max - fs                                             # right-align taps
        w_full = jnp.zeros((fs_max, V, nf), jnp.float32).at[off:].set(wid)
        w_cols.append(w_full.reshape(fs_max * V, nf))
        b_cols.append(b.reshape(1, nf))
        # conv positions >= L + fs - 1 don't exist in the PyTorch output -> mask them
        valid = (jnp.arange(t_pad) < (seq_len + fs - 1))[:, None]
        m_cols.append(jnp.where(valid, 0.0, -1e30) * jnp.ones((1, nf), jnp.float32))

    return {
        'wconv': jnp.concatenate(w_cols, axis=1),                     # (fs_max*V, F_sum)
        'bconv': jnp.concatenate(b_cols, axis=1),                     # (1, F_sum)
        'mask':  jnp.concatenate(m_cols, axis=1),                     # (t_pad, F_sum)
        'whead': jnp.concatenate([w.T for w in params['head_w']], axis=1),       # (F_sum, T_sum)
        'bhead': jnp.concatenate([b.reshape(1, -1) for b in params['head_b']], axis=1),
        'vpat':  jnp.tile(jnp.arange(V, dtype=jnp.int32), fs_max)[None, :],      # (1, fs_max*V)
    }


# ------------------------------- the kernel --------------------------------
def tagger_fused_kernel(ids_rep_ref,    # (TB*Tp, fs_max*V) int32  id(word, pos, tap), repeated V times
                        vpat_ref,       # (1, fs_max*V)     int32  tiled arange(V)
                        wconv_ref,      # (fs_max*V, F_sum) f32    embedding-folded conv filters
                        bconv_ref,      # (1, F_sum)        f32
                        mask_ref,       # (Tp, F_sum)       f32    0 / -1e30 position-validity mask
                        whead_ref,      # (F_sum, T_sum)    f32    fused, pre-transposed heads
                        bhead_ref,      # (1, T_sum)        f32
                        out_ref,        # (TB, T_sum)       f32
                        *, words_per_block, t_pad, act):
    # One-hot char ids for every (word, conv position, tap).  The matmul below is the
    # embedding lookup + zero padding + every tap of every conv filter, all at once.
    one_hot = (ids_rep_ref[...] == vpat_ref[...]).astype(jnp.float32)
    conv = jnp.dot(one_hot, wconv_ref[...],
                   preferred_element_type=jnp.float32) + bconv_ref[...]
    a = jnp.maximum(conv, 0.0) if act == 'relu' else jnp.tanh(conv)
    # (TB*Tp, F_sum) -> (TB, Tp, F_sum): Tp is a multiple of 8 -> tile-aligned split.
    a = a.reshape(words_per_block, t_pad, a.shape[-1]) + mask_ref[...][None]
    char_emb = jnp.max(a, axis=1)                        # position max-pool (TB, F_sum)
    # embed_dropout is identity (eval / p=0).  Both heads fused: one matmul, one store.
    out_ref[...] = (jnp.dot(char_emb, whead_ref[...],
                            preferred_element_type=jnp.float32) + bhead_ref[...])


# ------------------------------ JAX wrapper ---------------------------------
def _rep_spec(arr):
    return pl.BlockSpec(arr.shape, lambda i, n=arr.ndim: (0,) * n)


def tagger_forward(sentences, lengths, prep):
    """sentences: (B, L) int32 char ids; lengths is unused in the conv branch."""
    del lengths
    B, L = sentences.shape
    V = CHAR_VOCAB_SIZE
    fs_max = max(CHAR_FILTER_SIZES)
    t_pad = _round_up(L + fs_max - 1, 8)
    f_sum = sum(CHAR_NUM_FILTERS)
    t_sum = sum(TAGSET_SIZES)
    assert prep['mask'].shape == (t_pad, f_sum)

    # Tiny int32 index plumbing (fuses into one small op under jit): window the padded
    # char ids so row (b, s), column (k, v) of the in-kernel one-hot is id(b, s+k) == v.
    ids_pad = jnp.pad(sentences.astype(jnp.int32),
                      ((0, 0), (fs_max - 1, t_pad - L)), constant_values=PAD_INDEX)
    ids_win = jnp.stack([ids_pad[:, k:k + t_pad] for k in range(fs_max)], axis=-1)
    ids_rep = jnp.repeat(ids_win.reshape(B * t_pad, fs_max), V, axis=-1)   # (B*Tp, fs_max*V)

    # words per grid step: whole batch when small, else 256-word tiles (multiple of 8,
    # ~1.6 MB of f32 one-hot per block -> far under v7x's 64 MiB VMEM, double-buffered).
    tb = B if (B <= 256 or B % 256 != 0) else 256
    grid = (B // tb,)

    kernel = functools.partial(tagger_fused_kernel, words_per_block=tb,
                               t_pad=t_pad, act=CHAR_CONV_ACT)
    weights = (prep['vpat'], prep['wconv'], prep['bconv'], prep['mask'],
               prep['whead'], prep['bhead'])

    fused = pl.pallas_call(
        kernel,
        grid=grid,
        in_specs=[pl.BlockSpec((tb * t_pad, fs_max * V), lambda i: (i, 0))]
                 + [_rep_spec(w) for w in weights],
        out_specs=pl.BlockSpec((tb, t_sum), lambda i: (i, 0)),
        out_shape=jax.ShapeDtypeStruct((B, t_sum), jnp.float32),
        compiler_params=pltpu.CompilerParams(dimension_semantics=("parallel",)),
    )(ids_rep, *weights)

    # split the single lane-contiguous head output back into per-tagset logits
    outs, off = [], 0
    for ts in TAGSET_SIZES:
        outs.append(fused[:, off:off + ts])
        off += ts
    return outs


# --------------------------- pure-JAX reference ------------------------------
def reference_forward(sentences, params):
    x = jnp.take(params['emb'], sentences, axis=0)        # (B, L, E)
    pad = max(CHAR_FILTER_SIZES) - 1
    x_pad = jnp.pad(x, ((0, 0), (pad, pad), (0, 0)))
    L = sentences.shape[1]
    pooled = []
    for i, fs in enumerate(CHAR_FILTER_SIZES):
        off = pad - (fs - 1)
        t_out = L + fs - 1
        w = params['conv_w'][i]                           # (F, fs, E)
        acc = jnp.zeros((x.shape[0], t_out, w.shape[0]), jnp.float32)
        for k in range(fs):
            win = x_pad[:, off + k: off + k + t_out, :]
            acc = acc + jnp.einsum('bte,fe->btf', win, w[:, k, :])
        acc = acc + params['conv_b'][i][0][None, None, :]
        a = jnp.maximum(acc, 0.0) if CHAR_CONV_ACT == 'relu' else jnp.tanh(acc)
        pooled.append(jnp.max(a, axis=1))
    char_emb = jnp.concatenate(pooled, axis=1)
    return [char_emb @ params['head_w'][j].T + params['head_b'][j][0]
            for j in range(len(TAGSET_SIZES))]


# ------------------------- deterministic params ------------------------------
def init_params(key):
    keys = jax.random.split(key, 8)
    emb = 0.1 * jax.random.normal(keys[0], (CHAR_VOCAB_SIZE, CHAR_EMB_SIZE), jnp.float32)
    emb = emb.at[PAD_INDEX].set(0.0)                      # padding_idx row = 0
    conv_w, conv_b = [], []
    for i, (fs, nf) in enumerate(zip(CHAR_FILTER_SIZES, CHAR_NUM_FILTERS)):
        conv_w.append(0.1 * jax.random.normal(keys[1 + i], (nf, fs, CHAR_EMB_SIZE),
                                              jnp.float32))
        conv_b.append(0.01 * jnp.arange(nf, dtype=jnp.float32)[None, :])
    head_w, head_b = [], []
    for j, ts in enumerate(TAGSET_SIZES):
        head_w.append(0.1 * jax.random.normal(keys[4 + j], (ts, CHAR_SIZE), jnp.float32))
        head_b.append(0.01 * jnp.arange(ts, dtype=jnp.float32)[None, :])
    return {'emb': emb, 'conv_w': conv_w, 'conv_b': conv_b,
            'head_w': head_w, 'head_b': head_b}


# ----------------------------------- main ------------------------------------
if __name__ == "__main__":
    key = jax.random.PRNGKey(0)
    params = init_params(key)

    B, L = 2, 8
    sent_key = jax.random.fold_in(key, 123)
    sentences = jax.random.randint(sent_key, (B, L), 1, CHAR_VOCAB_SIZE, dtype=jnp.int32)
    sentences = sentences.at[1, L - 2:].set(PAD_INDEX)    # emulate padded chars
    lengths = jnp.array([L, L - 2], dtype=jnp.int32)

    prep = prepare_params(params, seq_len=L)              # once per checkpoint
    fwd = jax.jit(tagger_forward)
    outs = jax.block_until_ready(fwd(sentences, lengths, prep))

    refs = reference_forward(sentences, params)
    for o, r, ts in zip(outs, refs, TAGSET_SIZES):
        assert o.shape == (B, ts), o.shape
        assert jnp.allclose(o, r, atol=1e-4, rtol=1e-4), (o, r)

    print("KERNEL_OK")
</pallas_src>

<mosaic_0001>
module attributes {stable_mosaic.version = 11 : i64} {
  func.func @tagger_fused_kernel(%arg0: i32, %arg1: memref<32x100xi32, #tpu.memory_space<vmem>>, %arg2: memref<1x100xi32, #tpu.memory_space<vmem>>, %arg3: memref<100x24xf32, #tpu.memory_space<vmem>>, %arg4: memref<1x24xf32, #tpu.memory_space<vmem>>, %arg5: memref<16x24xf32, #tpu.memory_space<vmem>>, %arg6: memref<24x12xf32, #tpu.memory_space<vmem>>, %arg7: memref<1x12xf32, #tpu.memory_space<vmem>>, %arg8: memref<2x12xf32, #tpu.memory_space<vmem>>) attributes {dimension_semantics = [#tpu.dimension_semantics<parallel>], iteration_bounds = array<i64: 1>, scalar_prefetch = 0 : i64, scratch_operands = 0 : i64, tpu.core_type = #tpu.core_type<tc>, window_params = [{transform_indices = @transform_0, window_bounds = array<i64: 32, 100>}, {pipeline_mode = #tpu.pipeline_mode<synchronous>, transform_indices = @transform_1, window_bounds = array<i64: 1, 100>}, {pipeline_mode = #tpu.pipeline_mode<synchronous>, transform_indices = @transform_2, window_bounds = array<i64: 100, 24>}, {pipeline_mode = #tpu.pipeline_mode<synchronous>, transform_indices = @transform_3, window_bounds = array<i64: 1, 24>}, {pipeline_mode = #tpu.pipeline_mode<synchronous>, transform_indices = @transform_4, window_bounds = array<i64: 16, 24>}, {pipeline_mode = #tpu.pipeline_mode<synchronous>, transform_indices = @transform_5, window_bounds = array<i64: 24, 12>}, {pipeline_mode = #tpu.pipeline_mode<synchronous>, transform_indices = @transform_6, window_bounds = array<i64: 1, 12>}, {transform_indices = @transform_7, window_bounds = array<i64: 2, 12>}]} {
    %c0 = arith.constant 0 : index
    %c0_0 = arith.constant 0 : index
    %0 = vector.load %arg1[%c0, %c0_0] : memref<32x100xi32, #tpu.memory_space<vmem>>, vector<32x100xi32>
    %c0_1 = arith.constant 0 : index
    %c0_2 = arith.constant 0 : index
    %1 = vector.load %arg2[%c0_1, %c0_2] : memref<1x100xi32, #tpu.memory_space<vmem>>, vector<1x100xi32>
    %2 = vector.broadcast %1 : vector<1x100xi32> to vector<32x100xi32>
    %3 = arith.cmpi eq, %0, %2 : vector<32x100xi32>
    %4 = arith.extui %3 : vector<32x100xi1> to vector<32x100xi32>
    %5 = arith.sitofp %4 : vector<32x100xi32> to vector<32x100xf32>
    %c0_3 = arith.constant 0 : index
    %c0_4 = arith.constant 0 : index
    %6 = vector.load %arg3[%c0_3, %c0_4] : memref<100x24xf32, #tpu.memory_space<vmem>>, vector<100x24xf32>
    %cst = arith.constant dense<0.000000e+00> : vector<32x24xf32>
    %7 = tpu.matmul %5, %6, %cst {dimension_numbers = #tpu.dot_dimension_numbers<[1], [0], [0], [1], [0, 0, 1, 1], [], []>} : vector<32x100xf32>, vector<100x24xf32>, vector<32x24xf32> -> vector<32x24xf32>
    %c0_5 = arith.constant 0 : index
    %c0_6 = arith.constant 0 : index
    %8 = vector.load %arg4[%c0_5, %c0_6] : memref<1x24xf32, #tpu.memory_space<vmem>>, vector<1x24xf32>
    %9 = vector.broadcast %8 : vector<1x24xf32> to vector<32x24xf32>
    %10 = arith.addf %7, %9 : vector<32x24xf32>
    %11 = math.tanh %10 : vector<32x24xf32>
    %12 = vector.shape_cast %11 : vector<32x24xf32> to vector<2x16x24xf32>
    %c0_7 = arith.constant 0 : index
    %c0_8 = arith.constant 0 : index
    %13 = vector.load %arg5[%c0_7, %c0_8] : memref<16x24xf32, #tpu.memory_space<vmem>>, vector<16x24xf32>
    %14 = vector.shape_cast %13 : vector<16x24xf32> to vector<1x16x24xf32>
    %15 = vector.broadcast %14 : vector<1x16x24xf32> to vector<2x16x24xf32>
    %16 = arith.addf %12, %15 : vector<2x16x24xf32>
    %cst_9 = arith.constant dense<0xFF800000> : vector<2x24xf32>
    %17 = vector.multi_reduction <maximumf>, %16, %cst_9 [1] : vector<2x16x24xf32> to vector<2x24xf32>
    %c0_10 = arith.constant 0 : index
    %c0_11 = arith.constant 0 : index
    %18 = vector.load %arg6[%c0_10, %c0_11] : memref<24x12xf32, #tpu.memory_space<vmem>>, vector<24x12xf32>
    %cst_12 = arith.constant dense<0.000000e+00> : vector<2x12xf32>
    %19 = tpu.matmul %17, %18, %cst_12 {dimension_numbers = #tpu.dot_dimension_numbers<[1], [0], [0], [1], [0, 0, 1, 1], [], []>} : vector<2x24xf32>, vector<24x12xf32>, vector<2x12xf32> -> vector<2x12xf32>
    %c0_13 = arith.constant 0 : index
    %c0_14 = arith.constant 0 : index
    %20 = vector.load %arg7[%c0_13, %c0_14] : memref<1x12xf32, #tpu.memory_space<vmem>>, vector<1x12xf32>
    %21 = vector.broadcast %20 : vector<1x12xf32> to vector<2x12xf32>
    %22 = arith.addf %19, %21 : vector<2x12xf32>
    %c0_15 = arith.constant 0 : index
    %c0_16 = arith.constant 0 : index
    %23 = vector.load %arg8[%c0_15, %c0_16] : memref<2x12xf32, #tpu.memory_space<vmem>>, vector<2x12xf32>
    tpu.vector_store %arg8[%c0_15, %c0_16], %22 {strides = array<i32>} : memref<2x12xf32, #tpu.memory_space<vmem>>, vector<2x12xf32>,
    return
  }
  func.func @transform_0(%arg0: i32) -> (i32, i32) {
    %c0_i32 = arith.constant 0 : i32
    %c0_i32_0 = arith.constant 0 : i32
    return %arg0, %c0_i32 : i32, i32
  }
  func.func @transform_1(%arg0: i32) -> (i32, i32) {
    %c0_i32 = arith.constant 0 : i32
    %c0_i32_0 = arith.constant 0 : i32
    %c0_i32_1 = arith.constant 0 : i32
    return %c0_i32, %c0_i32_0 : i32, i32
  }
  func.func @transform_2(%arg0: i32) -> (i32, i32) {
    %c0_i32 = arith.constant 0 : i32
    %c0_i32_0 = arith.constant 0 : i32
    %c0_i32_1 = arith.constant 0 : i32
    return %c0_i32, %c0_i32_0 : i32, i32
  }
  func.func @transform_3(%arg0: i32) -> (i32, i32) {
    %c0_i32 = arith.constant 0 : i32
    %c0_i32_0 = arith.constant 0 : i32
    %c0_i32_1 = arith.constant 0 : i32
    return %c0_i32, %c0_i32_0 : i32, i32
  }
  func.func @transform_4(%arg0: i32) -> (i32, i32) {
    %c0_i32 = arith.constant 0 : i32
    %c0_i32_0 = arith.constant 0 : i32
    %c0_i32_1 = arith.constant 0 : i32
    return %c0_i32, %c0_i32_0 : i32, i32
  }
  func.func @transform_5(%arg0: i32) -> (i32, i32) {
    %c0_i32 = arith.constant 0 : i32
    %c0_i32_0 = arith.constant 0 : i32
    %c0_i32_1 = arith.constant 0 : i32
    return %c0_i32, %c0_i32_0 : i32, i32
  }
  func.func @transform_6(%arg0: i32) -> (i32, i32) {
    %c0_i32 = arith.constant 0 : i32
    %c0_i32_0 = arith.constant 0 : i32
    %c0_i32_1 = arith.constant 0 : i32
    return %c0_i32, %c0_i32_0 : i32, i32
  }
  func.func @transform_7(%arg0: i32) -> (i32, i32) {
    %c0_i32 = arith.constant 0 : i32
    %c0_i32_0 = arith.constant 0 : i32
    return %arg0, %c0_i32 : i32, i32
  }
}

</mosaic_0001>

<llo_original>
// kernel: tagger_forward.1
$region0: #{tagger_forward.1}
  #allocation0 [shape = 'u32[]', space=smem, size = 0x4, offset = 0x4, fixed_abs, tag = 'smem constant byte address 0x4 - core index']
  #allocation1 [shape = 'u32[144,128]{1,0:T(1,128)}', space=vmem, size = 0x12000, scoped, tag = 'internal scratch']
  %s0 = inlined_call_operand.vmem [shape: s32[32,100], index: 0, kind: input, shape index: {}]
  %s1 = inlined_call_operand.vmem [shape: s32[1,100], index: 1, kind: input, shape index: {}]
  %s2 = inlined_call_operand.vmem [shape: f32[100,24], index: 2, kind: input, shape index: {}]
  %s3 = inlined_call_operand.vmem [shape: f32[1,24], index: 3, kind: input, shape index: {}]
  %s4 = inlined_call_operand.vmem [shape: f32[16,24], index: 4, kind: input, shape index: {}]
  %s5 = inlined_call_operand.vmem [shape: f32[24,12], index: 5, kind: input, shape index: {}]
  %s6 = inlined_call_operand.vmem [shape: f32[1,12], index: 6, kind: input, shape index: {}]
  %s7 = inlined_call_operand.vmem [shape: f32[2,12], index: 7, kind: output, shape index: {}]
  %s8 = sld [smem:[#allocation0]]
  $region38: #{tagger_forward.1} parent=0
    _
  %s10 = ssub.s32 1, %s8
  %s11 = scalar_select 0, %s10, %s8
  // Predicated region
  $region2: #{tagger_forward.1} parent=0 // pred_check
    _
  $region3: #{tagger_forward.1} parent=0 // pred_check_branch
    %13 = sbr.rel (0) target = $region5
  $region4: #{tagger_forward.1} parent=0 // pred_region
    _
  $region5: #{tagger_forward.1} parent=0 // pred_fallthru
    _
  // Predicated region
  $region6: #{tagger_forward.1} parent=0 // pred_check
    _
  $region7: #{tagger_forward.1} parent=0 // pred_check_branch
    %15 = sbr.rel (0) target = $region9
  $region8: #{tagger_forward.1} parent=0 // pred_region
    _
  $region9: #{tagger_forward.1} parent=0 // pred_fallthru
    _
  // Predicated region
  $region10: #{tagger_forward.1} parent=0 // pred_check
    _
  $region11: #{tagger_forward.1} parent=0 // pred_check_branch
    %17 = sbr.rel (0) target = $region13
  $region12: #{tagger_forward.1} parent=0 // pred_region
    _
  $region13: #{tagger_forward.1} parent=0 // pred_fallthru
    _
  // Predicated region
  $region14: #{tagger_forward.1} parent=0 // pred_check
    _
  $region15: #{tagger_forward.1} parent=0 // pred_check_branch
    %19 = sbr.rel (0) target = $region17
  $region16: #{tagger_forward.1} parent=0 // pred_region
    _
  $region17: #{tagger_forward.1} parent=0 // pred_fallthru
    _
  // Predicated region
  $region18: #{tagger_forward.1} parent=0 // pred_check
    _
  $region19: #{tagger_forward.1} parent=0 // pred_check_branch
    %21 = sbr.rel (0) target = $region21
  $region20: #{tagger_forward.1} parent=0 // pred_region
    _
  $region21: #{tagger_forward.1} parent=0 // pred_fallthru
    _
  // Predicated region
  $region22: #{tagger_forward.1} parent=0 // pred_check
    _
  $region23: #{tagger_forward.1} parent=0 // pred_check_branch
    %23 = sbr.rel (0) target = $region25
  $region24: #{tagger_forward.1} parent=0 // pred_region
    _
  $region25: #{tagger_forward.1} parent=0 // pred_fallthru
    _
  // Predicated region
  $region26: #{tagger_forward.1} parent=0 // pred_check
    _
  $region27: #{tagger_forward.1} parent=0 // pred_check_branch
    %25 = sbr.rel (0) target = $region29
  $region28: #{tagger_forward.1} parent=0 // pred_region
    _
  $region29: #{tagger_forward.1} parent=0 // pred_fallthru
    _
  %v26 = vld [vmem:[%s0] sm:$0xff]
  %v27 = vld [vmem:[%s0 + $0x8] sm:$0xff]
  %v28 = vld [vmem:[%s0 + $0x10] sm:$0xff]
  %v29 = vld [vmem:[%s0 + $0x18] sm:$0xff]
  %v30 = vld [vmem:[%s1] sm:$0x1]
  %v31 = vlaneseq
  %v32 = vshrl.u32 %v31, 7
  %v33 = vsub.s32 0, %v32
  %v34 = vrot.slane %v30, %v33
  %vm35 = vcmp.eq.s32.totalorder %v26, %v34
  %vm36 = vcmp.eq.s32.totalorder %v27, %v34
  %vm37 = vcmp.eq.s32.totalorder %v28, %v34
  %vm38 = vcmp.eq.s32.totalorder %v29, %v34
  %v39 = vsel %vm35, 1, 0
  %v40 = vsel %vm36, 1, 0
  %v41 = vsel %vm37, 1, 0
  %v42 = vsel %vm38, 1, 0
  %v43 = vcvt.s32.f32 %v39
  %v44 = vcvt.s32.f32 %v40
  %v45 = vcvt.s32.f32 %v41
  %v46 = vcvt.s32.f32 %v42
  %v47 = vld [vmem:[%s2] sm:$0xff]
  %v48 = vld [vmem:[%s2 + $0x8] sm:$0xff]
  %v49 = vld [vmem:[%s2 + $0x10] sm:$0xff]
  %v50 = vld [vmem:[%s2 + $0x18] sm:$0xff]
  %v51 = vld [vmem:[%s2 + $0x20] sm:$0xff]
  %v52 = vld [vmem:[%s2 + $0x28] sm:$0xff]
  %v53 = vld [vmem:[%s2 + $0x30] sm:$0xff]
  %v54 = vld [vmem:[%s2 + $0x38] sm:$0xff]
  %v55 = vld [vmem:[%s2 + $0x40] sm:$0xff]
  %v56 = vld [vmem:[%s2 + $0x48] sm:$0xff]
  %v57 = vld [vmem:[%s2 + $0x50] sm:$0xff]
  %v58 = vld [vmem:[%s2 + $0x58] sm:$0xff]
  %v59 = vld [vmem:[%s2 + $0x60] sm:$0xf]
  %v60 = vld [vmem:[%s3] sm:$0x1]
  %v62 = vlaneseq
  %v63 = vshrl.u32 %v62, 7
  %v64 = vsub.s32 0, %v63
  %v65 = vrot.slane %v60, %v64
  %vm67 = vcmask 818176
  %v69 = vsel %vm67, %v43, 0
  %v72 = vsel %vm67, %v44, 0
  %v75 = vsel %vm67, %v45, 0
  %v78 = vsel %vm67, %v46, 0
  %vm80 = vcmask 1043456
  %v82 = vsel %vm80, %v59, 0
  %84 = vmatprep.subr.mxu0 0.0
  %85 = vmatpush1.msra.mxu0 0.0
  %86 = vmatprep.subr.mxu0 0.0
  %87 = vmatpush1.msra.mxu0 0.0
  %88 = vmatprep.subr.mxu0 0.0
  %89 = vmatpush1.msra.mxu0 0.0
  %90 = vmatprep.subr.mxu0 0.0
  %91 = vmatpush1.msra.mxu0 %v82
  %92 = vmatprep.subr.mxu0 0.0
  %93 = vmatpush1.msra.mxu0 %v58
  %94 = vmatprep.subr.mxu0 0.0
  %95 = vmatpush1.msra.mxu0 %v57
  %96 = vmatprep.subr.mxu0 0.0
  %97 = vmatpush1.msra.mxu0 %v56
  %98 = vmatprep.subr.mxu0 0.0
  %99 = vmatpush1.msra.mxu0 %v55
  %100 = vmatprep.subr.mxu0 0.0
  %101 = vmatpush1.msra.mxu0 %v54
  %102 = vmatprep.subr.mxu0 0.0
  %103 = vmatpush1.msra.mxu0 %v53
  %104 = vmatprep.subr.mxu0 0.0
  %105 = vmatpush1.msra.mxu0 %v52
  %106 = vmatprep.subr.mxu0 0.0
  %107 = vmatpush1.msra.mxu0 %v51
  %108 = vmatprep.subr.mxu0 0.0
  %109 = vmatpush1.msra.mxu0 %v50
  %110 = vmatprep.subr.mxu0 0.0
  %111 = vmatpush1.msra.mxu0 %v49
  %112 = vmatprep.subr.mxu0 0.0
  %113 = vmatpush1.msra.mxu0 %v48
  %114 = vmatprep.subr.mxu0 0.0
  %115 = vmatpush1.msra.mxu0 %v47
  %116 = vmatprep.subr.mxu0 0.0
  %117 = vmatpush2.msra.mxu0 0.0
  %118 = vmatprep.subr.mxu0 0.0
  %119 = vmatpush2.msra.mxu0 0.0
  %120 = vmatprep.subr.mxu0 0.0
  %121 = vmatpush2.msra.mxu0 0.0
  %122 = vmatprep.subr.mxu0 0.0
  %123 = vmatpush2.msra.mxu0 0.0
  %124 = vmatprep.subr.mxu0 0.0
  %125 = vmatpush2.msra.mxu0 0.0
  %126 = vmatprep.subr.mxu0 0.0
  %127 = vmatpush2.msra.mxu0 0.0
  %128 = vmatprep.subr.mxu0 0.0
  %129 = vmatpush2.msra.mxu0 0.0
  %130 = vmatprep.subr.mxu0 0.0
  %131 = vmatpush2.msra.mxu0 0.0
  %132 = vmatprep.subr.mxu0 0.0
  %133 = vmatpush2.msra.mxu0 0.0
  %134 = vmatprep.subr.mxu0 0.0
  %135 = vmatpush2.msra.mxu0 0.0
  %136 = vmatprep.subr.mxu0 0.0
  %137 = vmatpush2.msra.mxu0 0.0
  %138 = vmatprep.subr.mxu0 0.0
  %139 = vmatpush2.msra.mxu0 0.0
  %140 = vmatprep.subr.mxu0 0.0
  %141 = vmatpush2.msra.mxu0 0.0
  %142 = vmatprep.subr.mxu0 0.0
  %143 = vmatpush2.msra.mxu0 0.0
  %144 = vmatprep.subr.mxu0 0.0
  %145 = vmatpush2.msra.mxu0 0.0
  %146 = vmatprep.subr.mxu0 0.0
  %147 = vmatpush2.msra.mxu0 0.0
  %148 = vmatprep.mubr.f32.mxu0 0.0
  %149 = vmatmul.mubr.f32.gmra.mxu0 %v69
  %v150 = vpop.f32.mrf.mxu0
  %v151 = vadd.f32 %v65, %v150
  %v152 = vpop.f32.mrf.mxu0
  %153 = vmatprep.mubr.f32.mxu0 0.0
  %154 = vmatmul.mubr.f32.gmra.mxu0 %v72
  %v155 = vpop.f32.mrf.mxu0
  %v156 = vadd.f32 %v65, %v155
  %v157 = vpop.f32.mrf.mxu0
  %158 = vmatprep.mubr.f32.mxu0 0.0
  %159 = vmatmul.mubr.f32.gmra.mxu0 %v75
  %v160 = vpop.f32.mrf.mxu0
  %v161 = vadd.f32 %v65, %v160
  %v162 = vpop.f32.mrf.mxu0
  %163 = vmatprep.mubr.f32.mxu0 0.0
  %164 = vmatmul.mubr.f32.gmra.mxu0 %v78
  %v165 = vpop.f32.mrf.mxu0
  %v166 = vadd.f32 %v65, %v165
  %v167 = vpop.f32.mrf.mxu0
  %168 = vdwg.mxu0
  %v169 = vtanh.pop %v151
  %v170 = vtanh.pop %v156
  %v171 = vtanh.pop %v161
  %v172 = vtanh.pop %v166
  %v173 = vld [vmem:[%s4] sm:$0xff]
  %v174 = vld [vmem:[%s4 + $0x8] sm:$0xff]
  %v175 = vadd.f32 %v169, %v173
  %v176 = vadd.f32 %v170, %v174
  %v177 = vadd.f32 %v171, %v173
  %v178 = vadd.f32 %v172, %v174
  %vm179 = vcmask 195584
  %v180 = vsel %vm179, %v175, -inf
  %v181 = vsel %vm179, %v176, -inf
  %v182 = vmax.f32 %v180, %v181
  %v183 = vrot.slane %v182, 4
  %v184 = vmax.f32 %v182, %v183
  %v185 = vrot.slane %v184, 2
  %v186 = vmax.f32 %v184, %v185
  %v187 = vrot.slane %v186, 1
  %v188 = vmax.f32 %v186, %v187
  %v189 = vsel %vm179, %v177, -inf
  %v190 = vsel %vm179, %v178, -inf
  %v191 = vmax.f32 %v189, %v190
  %v192 = vrot.slane %v191, 4
  %v193 = vmax.f32 %v191, %v192
  %v194 = vrot.slane %v193, 2
  %v195 = vmax.f32 %v193, %v194
  %v196 = vrot.slane %v195, 1
  %v197 = vmax.f32 %v195, %v196
  %v198 = vld [vmem:[%s5] sm:$0xff]
  %v199 = vld [vmem:[%s5 + $0x8] sm:$0xff]
  %v200 = vld [vmem:[%s5 + $0x10] sm:$0xff]
  %v201 = vld [vmem:[%s6] sm:$0x1]
  %v203 = vlaneseq
  %v204 = vshrl.u32 %v203, 7
  %v205 = vsub.s32 0, %v204
  %v206 = vrot.slane %v201, %v205
  %vm210 = vcmask 1041409
  %v211 = vsel %vm210, %v197, %v188
  %v212 = vsel %vm179, %v211, 0
  %214 = vmatprep.subr.mxu0 0.0
  %215 = vmatpush1.msra.mxu0 0.0
  %216 = vmatprep.subr.mxu0 0.0
  %217 = vmatpush1.msra.mxu0 0.0
  %218 = vmatprep.subr.mxu0 0.0
  %219 = vmatpush1.msra.mxu0 0.0
  %220 = vmatprep.subr.mxu0 0.0
  %221 = vmatpush1.msra.mxu0 0.0
  %222 = vmatprep.subr.mxu0 0.0
  %223 = vmatpush1.msra.mxu0 0.0
  %224 = vmatprep.subr.mxu0 0.0
  %225 = vmatpush1.msra.mxu0 0.0
  %226 = vmatprep.subr.mxu0 0.0
  %227 = vmatpush1.msra.mxu0 0.0
  %228 = vmatprep.subr.mxu0 0.0
  %229 = vmatpush1.msra.mxu0 0.0
  %230 = vmatprep.subr.mxu0 0.0
  %231 = vmatpush1.msra.mxu0 0.0
  %232 = vmatprep.subr.mxu0 0.0
  %233 = vmatpush1.msra.mxu0 0.0
  %234 = vmatprep.subr.mxu0 0.0
  %235 = vmatpush1.msra.mxu0 0.0
  %236 = vmatprep.subr.mxu0 0.0
  %237 = vmatpush1.msra.mxu0 0.0
  %238 = vmatprep.subr.mxu0 0.0
  %239 = vmatpush1.msra.mxu0 0.0
  %240 = vmatprep.subr.mxu0 0.0
  %241 = vmatpush1.msra.mxu0 %v200
  %242 = vmatprep.subr.mxu0 0.0
  %243 = vmatpush1.msra.mxu0 %v199
  %244 = vmatprep.subr.mxu0 0.0
  %245 = vmatpush1.msra.mxu0 %v198
  %246 = vmatprep.subr.mxu0 0.0
  %247 = vmatpush2.msra.mxu0 0.0
  %248 = vmatprep.subr.mxu0 0.0
  %249 = vmatpush2.msra.mxu0 0.0
  %250 = vmatprep.subr.mxu0 0.0
  %251 = vmatpush2.msra.mxu0 0.0
  %252 = vmatprep.subr.mxu0 0.0
  %253 = vmatpush2.msra.mxu0 0.0
  %254 = vmatprep.subr.mxu0 0.0
  %255 = vmatpush2.msra.mxu0 0.0
  %256 = vmatprep.subr.mxu0 0.0
  %257 = vmatpush2.msra.mxu0 0.0
  %258 = vmatprep.subr.mxu0 0.0
  %259 = vmatpush2.msra.mxu0 0.0
  %260 = vmatprep.subr.mxu0 0.0
  %261 = vmatpush2.msra.mxu0 0.0
  %262 = vmatprep.subr.mxu0 0.0
  %263 = vmatpush2.msra.mxu0 0.0
  %264 = vmatprep.subr.mxu0 0.0
  %265 = vmatpush2.msra.mxu0 0.0
  %266 = vmatprep.subr.mxu0 0.0
  %267 = vmatpush2.msra.mxu0 0.0
  %268 = vmatprep.subr.mxu0 0.0
  %269 = vmatpush2.msra.mxu0 0.0
  %270 = vmatprep.subr.mxu0 0.0
  %271 = vmatpush2.msra.mxu0 0.0
  %272 = vmatprep.subr.mxu0 0.0
  %273 = vmatpush2.msra.mxu0 0.0
  %274 = vmatprep.subr.mxu0 0.0
  %275 = vmatpush2.msra.mxu0 0.0
  %276 = vmatprep.subr.mxu0 0.0
  %277 = vmatpush2.msra.mxu0 0.0
  %278 = vmatprep.mubr.f32.mxu0 0.0
  %279 = vmatmul.mubr.f32.gmra.mxu0 %v212
  %v280 = vpop.f32.mrf.mxu0
  %v281 = vadd.f32 %v206, %v280
  %v282 = vpop.f32.mrf.mxu0
  %283 = vdwg.mxu0
  %vm284 = vcmask 91136
  %285 = vst.msk [vmem:[%s7] sm:$0x3] %vm284, %v281
  // Predicated region
  $region30: #{tagger_forward.1} parent=0 // pred_check
    _
  $region31: #{tagger_forward.1} parent=0 // pred_check_branch
    %287 = sbr.rel (0) target = $region33
  $region32: #{tagger_forward.1} parent=0 // pred_region
    _
  $region33: #{tagger_forward.1} parent=0 // pred_fallthru
    _
  // Predicated region
  $region34: #{tagger_forward.1} parent=0 // pred_check
    _
  $region35: #{tagger_forward.1} parent=0 // pred_check_branch
    %289 = sbr.rel (0) target = $region37
  $region36: #{tagger_forward.1} parent=0 // pred_region
    _
  $region37: #{tagger_forward.1} parent=0 // pred_fallthru
    _

</llo_original>
